<compile_context>
chip_gen: v5e
topology: v5e:2x2
jax: 0.10.0
libtpu: 0.0.40
codegen_flags: <defaults>
</compile_context>

<pallas_src>
import jax
import jax.numpy as jnp
import numpy as np
from jax import lax
from jax.experimental import pallas as pl
from jax.experimental.pallas import tpu as pltpu


def _round_up(x, m):
    return (x + m - 1) // m * m


def _choose_bb(B, T, E):
    """Sessions per grid block: multiple of 8, capped so the double-buffered
    bf16 emb tile stays <= ~4 MiB per buffer (comfortable on v5e/v6e/v7x)."""
    bytes_per_session = T * E * 2                      # bf16 emb rows
    cap = max(8, ((4 << 20) // max(1, bytes_per_session)) // 8 * 8)
    return int(min(128, _round_up(B, 8), cap))


def stamp_kernel(lens_ref,            # VMEM [BB, 1]    int32
                 emb_ref,             # VMEM [BB, T, E] bfloat16
                 w1_ref,              # VMEM [E, E]     bfloat16 (in x out)
                 w2_ref, w3_ref,      # VMEM [E, E]     float32  (in x out)
                 w0_ref,              # VMEM [1, E]     float32  (row form)
                 ba_ref,              # VMEM [1, E]
                 maw_ref, mab_ref,    # VMEM [E, E], [1, E]
                 mbw_ref, mbb_ref,    # VMEM [E, E], [1, E]
                 out_ref):            # VMEM [BB, E]    float32
    BB, T, E = emb_ref.shape

    lens = lens_ref[...]                                   # [BB, 1] int32
    lens_f = lens.astype(jnp.float32)

    emb = emb_ref[...].astype(jnp.float32)                 # [BB, T, E] f32 for VPU work

    # last_inputs = emb[b, L_b - 1]  (vectorized one-hot over the time/sublane axis)
    t_idx = lax.broadcasted_iota(jnp.int32, (BB, T, 1), 1)
    last_mask = (t_idx == (lens - 1)[:, None, :]).astype(jnp.float32)   # [BB, T, 1]
    last = jnp.sum(emb * last_mask, axis=1)                              # [BB, E]

    # ms = mean over the (padded) sequence, divided by true length
    ms = jnp.sum(emb, axis=1) / lens_f                                   # [BB, E]

    # ---- count_alpha ----
    # One big bf16 MXU matmul for the context projection: [BB*T, E] @ [E, E].
    # (The cast back to bf16 is exact -- the values originated as bf16.)
    e_flat = emb.reshape(BB * T, E).astype(jnp.bfloat16)
    res_ctx = jnp.dot(e_flat, w1_ref[...],
                      preferred_element_type=jnp.float32).reshape(BB, T, E)

    res_asp = jnp.dot(last, w2_ref[...], preferred_element_type=jnp.float32)  # [BB, E]
    res_out = jnp.dot(ms, w3_ref[...], preferred_element_type=jnp.float32)    # [BB, E]
    bias_row = res_asp + res_out + ba_ref[...]                                # [BB, E]

    res_sum = res_ctx + bias_row[:, None, :]                                  # [BB, T, E]
    sig = jax.nn.sigmoid(res_sum)

    # alpha = sig @ w0^T computed as a lane reduction (avoids an N=1 MXU matmul)
    alpha = jnp.sum(sig * w0_ref[...][None, :, :], axis=-1, keepdims=True)    # [BB, T, 1]

    # vec = alpha^T @ emb  (weighted sum over the time axis)
    vec = jnp.sum(alpha * emb, axis=1)                                        # [BB, E]
    ma = vec + ms

    hs = jnp.tanh(jnp.dot(ma, maw_ref[...],
                          preferred_element_type=jnp.float32) + mab_ref[...])  # [BB, E]
    ht = jnp.tanh(jnp.dot(last, mbw_ref[...],
                          preferred_element_type=jnp.float32) + mbb_ref[...])  # [BB, E]

    out_ref[...] = hs * ht


def stamp_forward(item_seq, item_seq_len, params, *, block_b=None):
    """item_seq: [B, T] int32, item_seq_len: [B] int32 -> [B, E] float32."""
    B, T = item_seq.shape
    E = params["emb"].shape[1]

    BB = block_b or _choose_bb(B, T, E)
    Bp = _round_up(B, BB)
    pad = Bp - B
    if pad:
        item_seq = jnp.concatenate(
            [item_seq, jnp.zeros((pad, T), item_seq.dtype)], axis=0)
        item_seq_len = jnp.concatenate(
            [item_seq_len, jnp.ones((pad,), item_seq_len.dtype)], axis=0)

    # Embedding gather as XLA glue; table cast to bf16 first so the gathered
    # [Bp, T, E] slab (the dominant HBM->VMEM traffic) moves at half width.
    emb = params["emb"].astype(jnp.bfloat16)[item_seq]        # [Bp, T, E] bf16
    lens = item_seq_len.reshape(Bp, 1).astype(jnp.int32)      # [Bp, 1]

    # Linear weights pre-transposed to [in, out] so the hot path is plain x @ W.
    w1t = params["w1"].T.astype(jnp.bfloat16)
    w2t = params["w2"].T.astype(jnp.float32)
    w3t = params["w3"].T.astype(jnp.float32)
    w0r = params["w0"].reshape(1, E).astype(jnp.float32)      # row form for lane reduce
    ba = params["b_a"].reshape(1, E).astype(jnp.float32)
    mawt = params["maw"].T.astype(jnp.float32)
    mab = params["mab"].reshape(1, E).astype(jnp.float32)
    mbwt = params["mbw"].T.astype(jnp.float32)
    mbb = params["mbb"].reshape(1, E).astype(jnp.float32)

    full2 = lambda i: (0, 0)

    cost = pl.CostEstimate(
        flops=2 * Bp * T * E * E + 8 * Bp * E * E + 8 * Bp * T * E,
        transcendentals=Bp * T * E + 2 * Bp * E,
        bytes_accessed=Bp * T * E * 2 + Bp * E * 4 + Bp * 4
                       + E * E * 2 + 4 * E * E * 4 + 5 * E * 4,
    )

    # Note: the 9 weight/bias inputs have constant index maps, so Pallas only
    # DMAs them once; at E=32 the extra double-buffer copy is negligible, so we
    # skip pipeline_mode=pl.Buffered(1) here (worth adding at production E).
    out = pl.pallas_call(
        stamp_kernel,
        out_shape=jax.ShapeDtypeStruct((Bp, E), jnp.float32),
        grid_spec=pltpu.PrefetchScalarGridSpec(
            num_scalar_prefetch=0,
            grid=(Bp // BB,),
            in_specs=[
                pl.BlockSpec((BB, 1), lambda i: (i, 0)),        # lens
                pl.BlockSpec((BB, T, E), lambda i: (i, 0, 0)),  # emb slab (bf16)
                pl.BlockSpec((E, E), full2),                    # w1^T (bf16)
                pl.BlockSpec((E, E), full2),                    # w2^T
                pl.BlockSpec((E, E), full2),                    # w3^T
                pl.BlockSpec((1, E), full2),                    # w0 row
                pl.BlockSpec((1, E), full2),                    # b_a
                pl.BlockSpec((E, E), full2),                    # mlp_a weight^T
                pl.BlockSpec((1, E), full2),                    # mlp_a bias
                pl.BlockSpec((E, E), full2),                    # mlp_b weight^T
                pl.BlockSpec((1, E), full2),                    # mlp_b bias
            ],
            out_specs=pl.BlockSpec((BB, E), lambda i: (i, 0)),
        ),
        compiler_params=pltpu.CompilerParams(
            dimension_semantics=("parallel",)),    # shard batch across TCs on v7x
        cost_estimate=cost,
    )(lens, emb, w1t, w2t, w3t, w0r, ba, mawt, mab, mbwt, mbb)

    return out[:B]


def stamp_reference(item_seq, item_seq_len, p):
    """Pure-JAX reference matching the PyTorch forward semantics.

    Embeddings and w1 are rounded to bf16 (same quantization as the kernel's
    reduced-precision input path); all arithmetic is f32.
    """
    emb = p["emb"].astype(jnp.bfloat16).astype(jnp.float32)[item_seq]  # [B, T, E]
    w1 = p["w1"].astype(jnp.bfloat16).astype(jnp.float32)
    B, T, E = emb.shape
    last = emb[jnp.arange(B), item_seq_len - 1]                       # [B, E]
    ms = emb.sum(axis=1) / item_seq_len[:, None].astype(jnp.float32)  # [B, E]
    res_ctx = emb @ w1.T
    res_asp = (last @ p["w2"].T)[:, None, :]
    res_out = (ms @ p["w3"].T)[:, None, :]
    res_sum = res_ctx + res_asp + res_out + p["b_a"]
    sig = jax.nn.sigmoid(res_sum)
    alpha = (sig @ p["w0"].T)[..., 0]                                 # [B, T]
    vec = jnp.einsum("bt,bte->be", alpha, emb)
    ma = vec + ms
    hs = jnp.tanh(ma @ p["maw"].T + p["mab"])
    ht = jnp.tanh(last @ p["mbw"].T + p["mbb"])
    return hs * ht


def init_params(key, n_items, emb_size):
    ks = jax.random.split(key, 8)
    E = emb_size
    # matches PyTorch _init_weights: Embedding ~ N(0, 0.002), Linear ~ N(0, 0.05), bias = 0
    return {
        "emb": 0.002 * jax.random.normal(ks[0], (n_items, E), jnp.float32),
        "w1": 0.05 * jax.random.normal(ks[1], (E, E), jnp.float32),
        "w2": 0.05 * jax.random.normal(ks[2], (E, E), jnp.float32),
        "w3": 0.05 * jax.random.normal(ks[3], (E, E), jnp.float32),
        "w0": 0.05 * jax.random.normal(ks[4], (1, E), jnp.float32),
        "b_a": jnp.zeros((E,), jnp.float32),
        "maw": 0.05 * jax.random.normal(ks[5], (E, E), jnp.float32),
        "mab": jnp.zeros((E,), jnp.float32),
        "mbw": 0.05 * jax.random.normal(ks[6], (E, E), jnp.float32),
        "mbb": jnp.zeros((E,), jnp.float32),
    }


if __name__ == "__main__":
    key = jax.random.PRNGKey(0)
    n_items, emb_size = 50, 32
    B, T = 2, 8

    kp, ks, kl = jax.random.split(key, 3)
    params = init_params(kp, n_items, emb_size)
    item_seq = jax.random.randint(ks, (B, T), 1, n_items, dtype=jnp.int32)
    item_seq_len = jax.random.randint(kl, (B,), 1, T + 1, dtype=jnp.int32)

    out = jax.block_until_ready(stamp_forward(item_seq, item_seq_len, params))
    with jax.default_matmul_precision("highest"):
        ref = jax.block_until_ready(stamp_reference(item_seq, item_seq_len, params))

    out_np, ref_np = np.asarray(out), np.asarray(ref)
    rel_err = np.max(np.abs(out_np - ref_np)) / (np.max(np.abs(ref_np)) + 1e-30)
    assert out_np.shape == (B, emb_size)
    assert np.isfinite(out_np).all()
    assert rel_err < 5e-3, f"max normalized error too large: {rel_err}"
    print("KERNEL_OK")
</pallas_src>

<mosaic_0001>
module attributes {stable_mosaic.version = 11 : i64} {
  func.func @stamp_kernel(%arg0: i32, %arg1: memref<8x1xi32, #tpu.memory_space<vmem>>, %arg2: memref<8x8x32xbf16, #tpu.memory_space<vmem>>, %arg3: memref<32x32xbf16, #tpu.memory_space<vmem>>, %arg4: memref<32x32xf32, #tpu.memory_space<vmem>>, %arg5: memref<32x32xf32, #tpu.memory_space<vmem>>, %arg6: memref<1x32xf32, #tpu.memory_space<vmem>>, %arg7: memref<1x32xf32, #tpu.memory_space<vmem>>, %arg8: memref<32x32xf32, #tpu.memory_space<vmem>>, %arg9: memref<1x32xf32, #tpu.memory_space<vmem>>, %arg10: memref<32x32xf32, #tpu.memory_space<vmem>>, %arg11: memref<1x32xf32, #tpu.memory_space<vmem>>, %arg12: memref<8x32xf32, #tpu.memory_space<vmem>>) attributes {dimension_semantics = [#tpu.dimension_semantics<parallel>], iteration_bounds = array<i64: 1>, scalar_prefetch = 0 : i64, scratch_operands = 0 : i64, tpu.core_type = #tpu.core_type<tc>, window_params = [{transform_indices = @transform_0, window_bounds = array<i64: 8, 1>}, {transform_indices = @transform_1, window_bounds = array<i64: 8, 8, 32>}, {pipeline_mode = #tpu.pipeline_mode<synchronous>, transform_indices = @transform_2, window_bounds = array<i64: 32, 32>}, {pipeline_mode = #tpu.pipeline_mode<synchronous>, transform_indices = @transform_3, window_bounds = array<i64: 32, 32>}, {pipeline_mode = #tpu.pipeline_mode<synchronous>, transform_indices = @transform_4, window_bounds = array<i64: 32, 32>}, {pipeline_mode = #tpu.pipeline_mode<synchronous>, transform_indices = @transform_5, window_bounds = array<i64: 1, 32>}, {pipeline_mode = #tpu.pipeline_mode<synchronous>, transform_indices = @transform_6, window_bounds = array<i64: 1, 32>}, {pipeline_mode = #tpu.pipeline_mode<synchronous>, transform_indices = @transform_7, window_bounds = array<i64: 32, 32>}, {pipeline_mode = #tpu.pipeline_mode<synchronous>, transform_indices = @transform_8, window_bounds = array<i64: 1, 32>}, {pipeline_mode = #tpu.pipeline_mode<synchronous>, transform_indices = @transform_9, window_bounds = array<i64: 32, 32>}, {pipeline_mode = #tpu.pipeline_mode<synchronous>, transform_indices = @transform_10, window_bounds = array<i64: 1, 32>}, {transform_indices = @transform_11, window_bounds = array<i64: 8, 32>}]} {
    %c0 = arith.constant 0 : index
    %c0_0 = arith.constant 0 : index
    %0 = vector.load %arg1[%c0, %c0_0] : memref<8x1xi32, #tpu.memory_space<vmem>>, vector<8x1xi32>
    %1 = arith.sitofp %0 : vector<8x1xi32> to vector<8x1xf32>
    %c0_1 = arith.constant 0 : index
    %c0_2 = arith.constant 0 : index
    %c0_3 = arith.constant 0 : index
    %2 = vector.load %arg2[%c0_1, %c0_2, %c0_3] : memref<8x8x32xbf16, #tpu.memory_space<vmem>>, vector<8x8x32xbf16>
    %3 = arith.extf %2 : vector<8x8x32xbf16> to vector<8x8x32xf32>
    %4 = tpu.iota {dimensions = array<i32: 1>} : vector<8x8x1xi32>
    %c1_i32 = arith.constant 1 : i32
    %5 = vector.broadcast %c1_i32 : i32 to vector<8x1xi32>
    %6 = arith.subi %0, %5 : vector<8x1xi32>
    %7 = vector.shape_cast %6 : vector<8x1xi32> to vector<8x1x1xi32>
    %8 = vector.broadcast %7 : vector<8x1x1xi32> to vector<8x8x1xi32>
    %9 = arith.cmpi eq, %4, %8 : vector<8x8x1xi32>
    %10 = arith.extui %9 : vector<8x8x1xi1> to vector<8x8x1xi32>
    %11 = arith.sitofp %10 : vector<8x8x1xi32> to vector<8x8x1xf32>
    %12 = vector.broadcast %11 : vector<8x8x1xf32> to vector<8x8x32xf32>
    %13 = arith.mulf %3, %12 : vector<8x8x32xf32>
    %cst = arith.constant dense<0.000000e+00> : vector<8x32xf32>
    %14 = vector.multi_reduction <add>, %13, %cst [1] : vector<8x8x32xf32> to vector<8x32xf32>
    %cst_4 = arith.constant dense<0.000000e+00> : vector<8x32xf32>
    %15 = vector.multi_reduction <add>, %3, %cst_4 [1] : vector<8x8x32xf32> to vector<8x32xf32>
    %16 = vector.broadcast %1 : vector<8x1xf32> to vector<8x32xf32>
    %17 = arith.divf %15, %16 : vector<8x32xf32>
    %18 = vector.shape_cast %3 : vector<8x8x32xf32> to vector<64x32xf32>
    %19 = arith.truncf %18 : vector<64x32xf32> to vector<64x32xbf16>
    %c0_5 = arith.constant 0 : index
    %c0_6 = arith.constant 0 : index
    %20 = vector.load %arg3[%c0_5, %c0_6] : memref<32x32xbf16, #tpu.memory_space<vmem>>, vector<32x32xbf16>
    %cst_7 = arith.constant dense<0.000000e+00> : vector<64x32xf32>
    %21 = tpu.matmul %19, %20, %cst_7 {dimension_numbers = #tpu.dot_dimension_numbers<[1], [0], [0], [1], [0, 0, 1, 1], [], []>} : vector<64x32xbf16>, vector<32x32xbf16>, vector<64x32xf32> -> vector<64x32xf32>
    %22 = vector.shape_cast %21 : vector<64x32xf32> to vector<8x8x32xf32>
    %c0_8 = arith.constant 0 : index
    %c0_9 = arith.constant 0 : index
    %23 = vector.load %arg4[%c0_8, %c0_9] : memref<32x32xf32, #tpu.memory_space<vmem>>, vector<32x32xf32>
    %cst_10 = arith.constant dense<0.000000e+00> : vector<8x32xf32>
    %24 = tpu.matmul %14, %23, %cst_10 {dimension_numbers = #tpu.dot_dimension_numbers<[1], [0], [0], [1], [0, 0, 1, 1], [], []>} : vector<8x32xf32>, vector<32x32xf32>, vector<8x32xf32> -> vector<8x32xf32>
    %c0_11 = arith.constant 0 : index
    %c0_12 = arith.constant 0 : index
    %25 = vector.load %arg5[%c0_11, %c0_12] : memref<32x32xf32, #tpu.memory_space<vmem>>, vector<32x32xf32>
    %cst_13 = arith.constant dense<0.000000e+00> : vector<8x32xf32>
    %26 = tpu.matmul %17, %25, %cst_13 {dimension_numbers = #tpu.dot_dimension_numbers<[1], [0], [0], [1], [0, 0, 1, 1], [], []>} : vector<8x32xf32>, vector<32x32xf32>, vector<8x32xf32> -> vector<8x32xf32>
    %27 = arith.addf %24, %26 : vector<8x32xf32>
    %c0_14 = arith.constant 0 : index
    %c0_15 = arith.constant 0 : index
    %28 = vector.load %arg7[%c0_14, %c0_15] : memref<1x32xf32, #tpu.memory_space<vmem>>, vector<1x32xf32>
    %29 = vector.broadcast %28 : vector<1x32xf32> to vector<8x32xf32>
    %30 = arith.addf %27, %29 : vector<8x32xf32>
    %31 = vector.shape_cast %30 : vector<8x32xf32> to vector<8x1x32xf32>
    %32 = vector.broadcast %31 : vector<8x1x32xf32> to vector<8x8x32xf32>
    %33 = arith.addf %22, %32 : vector<8x8x32xf32>
    %34 = arith.negf %33 : vector<8x8x32xf32>
    %35 = math.exp %34 : vector<8x8x32xf32>
    %cst_16 = arith.constant 1.000000e+00 : f32
    %36 = vector.broadcast %cst_16 : f32 to vector<8x8x32xf32>
    %37 = arith.addf %36, %35 : vector<8x8x32xf32>
    %38 = arith.divf %36, %37 : vector<8x8x32xf32>
    %c0_17 = arith.constant 0 : index
    %c0_18 = arith.constant 0 : index
    %39 = vector.load %arg6[%c0_17, %c0_18] : memref<1x32xf32, #tpu.memory_space<vmem>>, vector<1x32xf32>
    %40 = vector.shape_cast %39 : vector<1x32xf32> to vector<1x1x32xf32>
    %41 = vector.broadcast %40 : vector<1x1x32xf32> to vector<8x8x32xf32>
    %42 = arith.mulf %38, %41 : vector<8x8x32xf32>
    %cst_19 = arith.constant dense<0.000000e+00> : vector<8x8xf32>
    %43 = vector.multi_reduction <add>, %42, %cst_19 [2] : vector<8x8x32xf32> to vector<8x8xf32>
    %44 = vector.shape_cast %43 : vector<8x8xf32> to vector<8x8x1xf32>
    %45 = vector.broadcast %44 : vector<8x8x1xf32> to vector<8x8x32xf32>
    %46 = arith.mulf %45, %3 : vector<8x8x32xf32>
    %cst_20 = arith.constant dense<0.000000e+00> : vector<8x32xf32>
    %47 = vector.multi_reduction <add>, %46, %cst_20 [1] : vector<8x8x32xf32> to vector<8x32xf32>
    %48 = arith.addf %47, %17 : vector<8x32xf32>
    %c0_21 = arith.constant 0 : index
    %c0_22 = arith.constant 0 : index
    %49 = vector.load %arg8[%c0_21, %c0_22] : memref<32x32xf32, #tpu.memory_space<vmem>>, vector<32x32xf32>
    %cst_23 = arith.constant dense<0.000000e+00> : vector<8x32xf32>
    %50 = tpu.matmul %48, %49, %cst_23 {dimension_numbers = #tpu.dot_dimension_numbers<[1], [0], [0], [1], [0, 0, 1, 1], [], []>} : vector<8x32xf32>, vector<32x32xf32>, vector<8x32xf32> -> vector<8x32xf32>
    %c0_24 = arith.constant 0 : index
    %c0_25 = arith.constant 0 : index
    %51 = vector.load %arg9[%c0_24, %c0_25] : memref<1x32xf32, #tpu.memory_space<vmem>>, vector<1x32xf32>
    %52 = vector.broadcast %51 : vector<1x32xf32> to vector<8x32xf32>
    %53 = arith.addf %50, %52 : vector<8x32xf32>
    %54 = math.tanh %53 : vector<8x32xf32>
    %c0_26 = arith.constant 0 : index
    %c0_27 = arith.constant 0 : index
    %55 = vector.load %arg10[%c0_26, %c0_27] : memref<32x32xf32, #tpu.memory_space<vmem>>, vector<32x32xf32>
    %cst_28 = arith.constant dense<0.000000e+00> : vector<8x32xf32>
    %56 = tpu.matmul %14, %55, %cst_28 {dimension_numbers = #tpu.dot_dimension_numbers<[1], [0], [0], [1], [0, 0, 1, 1], [], []>} : vector<8x32xf32>, vector<32x32xf32>, vector<8x32xf32> -> vector<8x32xf32>
    %c0_29 = arith.constant 0 : index
    %c0_30 = arith.constant 0 : index
    %57 = vector.load %arg11[%c0_29, %c0_30] : memref<1x32xf32, #tpu.memory_space<vmem>>, vector<1x32xf32>
    %58 = vector.broadcast %57 : vector<1x32xf32> to vector<8x32xf32>
    %59 = arith.addf %56, %58 : vector<8x32xf32>
    %60 = math.tanh %59 : vector<8x32xf32>
    %61 = arith.mulf %54, %60 : vector<8x32xf32>
    %c0_31 = arith.constant 0 : index
    %c0_32 = arith.constant 0 : index
    %62 = vector.load %arg12[%c0_31, %c0_32] : memref<8x32xf32, #tpu.memory_space<vmem>>, vector<8x32xf32>
    tpu.vector_store %arg12[%c0_31, %c0_32], %61 {strides = array<i32>} : memref<8x32xf32, #tpu.memory_space<vmem>>, vector<8x32xf32>,
    return
  }
  func.func @transform_0(%arg0: i32) -> (i32, i32) {
    %c0_i32 = arith.constant 0 : i32
    %c0_i32_0 = arith.constant 0 : i32
    return %arg0, %c0_i32 : i32, i32
  }
  func.func @transform_1(%arg0: i32) -> (i32, i32, i32) {
    %c0_i32 = arith.constant 0 : i32
    %c0_i32_0 = arith.constant 0 : i32
    %c0_i32_1 = arith.constant 0 : i32
    return %arg0, %c0_i32, %c0_i32_0 : i32, i32, i32
  }
  func.func @transform_2(%arg0: i32) -> (i32, i32) {
    %c0_i32 = arith.constant 0 : i32
    %c0_i32_0 = arith.constant 0 : i32
    %c0_i32_1 = arith.constant 0 : i32
    return %c0_i32, %c0_i32_0 : i32, i32
  }
  func.func @transform_3(%arg0: i32) -> (i32, i32) {
    %c0_i32 = arith.constant 0 : i32
    %c0_i32_0 = arith.constant 0 : i32
    %c0_i32_1 = arith.constant 0 : i32
    return %c0_i32, %c0_i32_0 : i32, i32
  }
  func.func @transform_4(%arg0: i32) -> (i32, i32) {
    %c0_i32 = arith.constant 0 : i32
    %c0_i32_0 = arith.constant 0 : i32
    %c0_i32_1 = arith.constant 0 : i32
    return %c0_i32, %c0_i32_0 : i32, i32
  }
  func.func @transform_5(%arg0: i32) -> (i32, i32) {
    %c0_i32 = arith.constant 0 : i32
    %c0_i32_0 = arith.constant 0 : i32
    %c0_i32_1 = arith.constant 0 : i32
    return %c0_i32, %c0_i32_0 : i32, i32
  }
  func.func @transform_6(%arg0: i32) -> (i32, i32) {
    %c0_i32 = arith.constant 0 : i32
    %c0_i32_0 = arith.constant 0 : i32
    %c0_i32_1 = arith.constant 0 : i32
    return %c0_i32, %c0_i32_0 : i32, i32
  }
  func.func @transform_7(%arg0: i32) -> (i32, i32) {
    %c0_i32 = arith.constant 0 : i32
    %c0_i32_0 = arith.constant 0 : i32
    %c0_i32_1 = arith.constant 0 : i32
    return %c0_i32, %c0_i32_0 : i32, i32
  }
  func.func @transform_8(%arg0: i32) -> (i32, i32) {
    %c0_i32 = arith.constant 0 : i32
    %c0_i32_0 = arith.constant 0 : i32
    %c0_i32_1 = arith.constant 0 : i32
    return %c0_i32, %c0_i32_0 : i32, i32
  }
  func.func @transform_9(%arg0: i32) -> (i32, i32) {
    %c0_i32 = arith.constant 0 : i32
    %c0_i32_0 = arith.constant 0 : i32
    %c0_i32_1 = arith.constant 0 : i32
    return %c0_i32, %c0_i32_0 : i32, i32
  }
  func.func @transform_10(%arg0: i32) -> (i32, i32) {
    %c0_i32 = arith.constant 0 : i32
    %c0_i32_0 = arith.constant 0 : i32
    %c0_i32_1 = arith.constant 0 : i32
    return %c0_i32, %c0_i32_0 : i32, i32
  }
  func.func @transform_11(%arg0: i32) -> (i32, i32) {
    %c0_i32 = arith.constant 0 : i32
    %c0_i32_0 = arith.constant 0 : i32
    return %arg0, %c0_i32 : i32, i32
  }
}

</mosaic_0001>

<llo_original>
// kernel: tpu_custom_call.1
$region0: #{tpu_custom_call.1}
  #allocation0 [shape = 'u32[]', space=smem, size = 0x4, offset = 0x4, fixed_abs, tag = 'smem constant byte address 0x4 - core index']
  #allocation1 [shape = 'u32[72,128]{1,0:T(1,128)}', space=vmem, size = 0x9000, scoped, tag = 'internal scratch']
  %s0 = inlined_call_operand.vmem [shape: s32[8,1], index: 0, kind: input, shape index: {}]
  %s1 = inlined_call_operand.hbm [shape: bf16[8,8,32], index: 1, kind: input, shape index: {}]
  %s2 = inlined_call_operand.hbm [shape: bf16[32,32], index: 2, kind: input, shape index: {}]
  %s3 = inlined_call_operand.hbm [shape: f32[32,32], index: 3, kind: input, shape index: {}]
  %s4 = inlined_call_operand.hbm [shape: f32[32,32], index: 4, kind: input, shape index: {}]
  %s5 = inlined_call_operand.vmem [shape: f32[1,32], index: 5, kind: input, shape index: {}]
  %s6 = inlined_call_operand.vmem [shape: f32[1,32], index: 6, kind: input, shape index: {}]
  %s7 = inlined_call_operand.hbm [shape: f32[32,32], index: 7, kind: input, shape index: {}]
  %s8 = inlined_call_operand.vmem [shape: f32[1,32], index: 8, kind: input, shape index: {}]
  %s9 = inlined_call_operand.hbm [shape: f32[32,32], index: 9, kind: input, shape index: {}]
  %s10 = inlined_call_operand.vmem [shape: f32[1,32], index: 10, kind: input, shape index: {}]
  %s11 = inlined_call_operand.hbm [shape: f32[8,32], index: 11, kind: output, shape index: {}]
  %s12 = sld [smem:[#allocation0]]
  $region78: #{tpu_custom_call.1} parent=0
    _
  %s14 = ssub.s32 1, %s12
  %s15 = scalar_select 0, %s14, %s12
  $region1: #{tpu_custom_call.1} parent=0
    #allocation2 [shape = 'u8[16384]{0}', space=vmem, size = 0x4000, scoped, tag = 'input window, operand 1, single buffered']
    #allocation3 [shape = 's32[1]{0}', space=sflag, size = 0x4, scoped, tag = 'scoped memory for tpu_custom_call.1']
    #allocation4 [shape = 's32[1]{0}', space=sflag, size = 0x4, scoped, tag = 'scoped memory for tpu_custom_call.1']
    #allocation5 [shape = 'u8[8192]{0}', space=vmem, size = 0x2000, scoped, tag = 'input window, operand 2, single buffered']
    #allocation6 [shape = 's32[1]{0}', space=sflag, size = 0x4, scoped, tag = 'scoped memory for tpu_custom_call.1']
    #allocation7 [shape = 'u8[16384]{0}', space=vmem, size = 0x4000, scoped, tag = 'input window, operand 3, single buffered']
    #allocation8 [shape = 'u8[16384]{0}', space=vmem, size = 0x4000, scoped, tag = 'input window, operand 4, single buffered']
    #allocation9 [shape = 's32[1]{0}', space=sflag, size = 0x4, scoped, tag = 'scoped memory for tpu_custom_call.1']
    #allocation10 [shape = 'u8[16384]{0}', space=vmem, size = 0x4000, scoped, tag = 'input window, operand 7, single buffered']
    #allocation11 [shape = 'u8[16384]{0}', space=vmem, size = 0x4000, scoped, tag = 'input window, operand 9, single buffered']
    #allocation12 [shape = 's32[1]{0}', space=sflag, size = 0x4, scoped, tag = 'scoped memory for tpu_custom_call.1']
    #allocation13 [shape = 'u8[4096]{0}', space=vmem, size = 0x1000, scoped, tag = 'output window, operand 0, single buffered']
    %16 = vsyncpa [#allocation3], 0
    %17 = vsyncpa [#allocation6], 0
    %18 = vsyncpa [#allocation9], 0
    %19 = vsyncpa [#allocation12], 0
    %20 = vsyncpa [#allocation4], 0
    // Predicated region
    $region2: #{tpu_custom_call.1} parent=1 // pred_check
      _
    $region3: #{tpu_custom_call.1} parent=1 // pred_check_branch
      %22 = sbr.rel (0) target = $region5
    $region4: #{tpu_custom_call.1} parent=1 // pred_region
      _
    $region5: #{tpu_custom_call.1} parent=1 // pred_fallthru
      _
    // Predicated region
    $region6: #{tpu_custom_call.1} parent=1 // pred_check
      _
    $region7: #{tpu_custom_call.1} parent=1 // pred_check_branch
      %24 = sbr.rel (0) target = $region9
    $region8: #{tpu_custom_call.1} parent=1 // pred_region
      %26 = vsyncadd [#allocation3], 0
      %s27 = sshll.u32 %s1, 4
      %s28 = int_to_ptr.hbm [resolvable:$true] %s27
      %s29 = sshll.u32 [#allocation2], 4
      %s30 = int_to_ptr.vmem [resolvable:$true] %s29
      %35 = dma.hbm_to_vmem [thread:$0]  %s28, 512, %s30, [#allocation3], 64, 64, 4
    $region9: #{tpu_custom_call.1} parent=1 // pred_fallthru
      _
    // Predicated region
    $region10: #{tpu_custom_call.1} parent=1 // pred_check
      _
    $region11: #{tpu_custom_call.1} parent=1 // pred_check_branch
      %37 = sbr.rel (0) target = $region13
    $region12: #{tpu_custom_call.1} parent=1 // pred_region
      %39 = vsyncadd [#allocation6], 0
      %s40 = sshll.u32 %s2, 4
      %s41 = int_to_ptr.hbm [resolvable:$true] %s40
      %s42 = sshll.u32 [#allocation5], 4
      %s43 = int_to_ptr.vmem [resolvable:$true] %s42
      %48 = dma.hbm_to_vmem [thread:$0]  %s41, 256, %s43, [#allocation6], 64, 64, 4
    $region13: #{tpu_custom_call.1} parent=1 // pred_fallthru
      _
    // Predicated region
    $region14: #{tpu_custom_call.1} parent=1 // pred_check
      _
    $region15: #{tpu_custom_call.1} parent=1 // pred_check_branch
      %50 = sbr.rel (0) target = $region17
    $region16: #{tpu_custom_call.1} parent=1 // pred_region
      %52 = vsyncadd [#allocation6], 0
      %s53 = sshll.u32 %s3, 4
      %s54 = int_to_ptr.hbm [resolvable:$true] %s53
      %s55 = sshll.u32 [#allocation7], 4
      %s56 = int_to_ptr.vmem [resolvable:$true] %s55
      %61 = dma.hbm_to_vmem [thread:$0]  %s54, 512, %s56, [#allocation6], 128, 128, 8
    $region17: #{tpu_custom_call.1} parent=1 // pred_fallthru
      _
    // Predicated region
    $region18: #{tpu_custom_call.1} parent=1 // pred_check
      _
    $region19: #{tpu_custom_call.1} parent=1 // pred_check_branch
      %63 = sbr.rel (0) target = $region21
    $region20: #{tpu_custom_call.1} parent=1 // pred_region
      %65 = vsyncadd [#allocation9], 0
      %s66 = sshll.u32 %s4, 4
      %s67 = int_to_ptr.hbm [resolvable:$true] %s66
      %s68 = sshll.u32 [#allocation8], 4
      %s69 = int_to_ptr.vmem [resolvable:$true] %s68
      %74 = dma.hbm_to_vmem [thread:$0]  %s67, 512, %s69, [#allocation9], 128, 128, 8
    $region21: #{tpu_custom_call.1} parent=1 // pred_fallthru
      _
    // Predicated region
    $region22: #{tpu_custom_call.1} parent=1 // pred_check
      _
    $region23: #{tpu_custom_call.1} parent=1 // pred_check_branch
      %76 = sbr.rel (0) target = $region25
    $region24: #{tpu_custom_call.1} parent=1 // pred_region
      _
    $region25: #{tpu_custom_call.1} parent=1 // pred_fallthru
      _
    // Predicated region
    $region26: #{tpu_custom_call.1} parent=1 // pred_check
      _
    $region27: #{tpu_custom_call.1} parent=1 // pred_check_branch
      %78 = sbr.rel (0) target = $region29
    $region28: #{tpu_custom_call.1} parent=1 // pred_region
      _
    $region29: #{tpu_custom_call.1} parent=1 // pred_fallthru
      _
    // Predicated region
    $region30: #{tpu_custom_call.1} parent=1 // pred_check
      _
    $region31: #{tpu_custom_call.1} parent=1 // pred_check_branch
      %80 = sbr.rel (0) target = $region33
    $region32: #{tpu_custom_call.1} parent=1 // pred_region
      %82 = vsyncadd [#allocation9], 0
      %s83 = sshll.u32 %s7, 4
      %s84 = int_to_ptr.hbm [resolvable:$true] %s83
      %s85 = sshll.u32 [#allocation10], 4
      %s86 = int_to_ptr.vmem [resolvable:$true] %s85
      %91 = dma.hbm_to_vmem [thread:$0]  %s84, 512, %s86, [#allocation9], 128, 128, 8
    $region33: #{tpu_custom_call.1} parent=1 // pred_fallthru
      _
    // Predicated region
    $region34: #{tpu_custom_call.1} parent=1 // pred_check
      _
    $region35: #{tpu_custom_call.1} parent=1 // pred_check_branch
      %93 = sbr.rel (0) target = $region37
    $region36: #{tpu_custom_call.1} parent=1 // pred_region
      _
    $region37: #{tpu_custom_call.1} parent=1 // pred_fallthru
      _
    // Predicated region
    $region38: #{tpu_custom_call.1} parent=1 // pred_check
      _
    $region39: #{tpu_custom_call.1} parent=1 // pred_check_branch
      %95 = sbr.rel (0) target = $region41
    $region40: #{tpu_custom_call.1} parent=1 // pred_region
      %97 = vsyncadd [#allocation12], 0
      %s98 = sshll.u32 %s9, 4
      %s99 = int_to_ptr.hbm [resolvable:$true] %s98
      %s100 = sshll.u32 [#allocation11], 4
      %s101 = int_to_ptr.vmem [resolvable:$true] %s100
      %106 = dma.hbm_to_vmem [thread:$0]  %s99, 512, %s101, [#allocation12], 128, 128, 8
    $region41: #{tpu_custom_call.1} parent=1 // pred_fallthru
      _
    // Predicated region
    $region42: #{tpu_custom_call.1} parent=1 // pred_check
      _
    $region43: #{tpu_custom_call.1} parent=1 // pred_check_branch
      %108 = sbr.rel (0) target = $region45
    $region44: #{tpu_custom_call.1} parent=1 // pred_region
      _
    $region45: #{tpu_custom_call.1} parent=1 // pred_fallthru
      _
    // Predicated region
    $region46: #{tpu_custom_call.1} parent=1 // pred_check
      _
    $region47: #{tpu_custom_call.1} parent=1 // pred_check_branch
      %110 = sbr.rel (0) target = $region49
    $region48: #{tpu_custom_call.1} parent=1 // pred_region
      %112 = dma.done [#allocation3], 512
    $region49: #{tpu_custom_call.1} parent=1 // pred_fallthru
      _
    // Predicated region
    $region50: #{tpu_custom_call.1} parent=1 // pred_check
      _
    $region51: #{tpu_custom_call.1} parent=1 // pred_check_branch
      %114 = sbr.rel (0) target = $region53
    $region52: #{tpu_custom_call.1} parent=1 // pred_region
      %116 = dma.done [#allocation6], 256
    $region53: #{tpu_custom_call.1} parent=1 // pred_fallthru
      _
    // Predicated region
    $region54: #{tpu_custom_call.1} parent=1 // pred_check
      _
    $region55: #{tpu_custom_call.1} parent=1 // pred_check_branch
      %118 = sbr.rel (0) target = $region57
    $region56: #{tpu_custom_call.1} parent=1 // pred_region
      %120 = dma.done [#allocation6], 512
    $region57: #{tpu_custom_call.1} parent=1 // pred_fallthru
      _
    // Predicated region
    $region58: #{tpu_custom_call.1} parent=1 // pred_check
      _
    $region59: #{tpu_custom_call.1} parent=1 // pred_check_branch
      %122 = sbr.rel (0) target = $region61
    $region60: #{tpu_custom_call.1} parent=1 // pred_region
      %124 = dma.done [#allocation9], 512
    $region61: #{tpu_custom_call.1} parent=1 // pred_fallthru
      _
    // Predicated region
    $region62: #{tpu_custom_call.1} parent=1 // pred_check
      _
    $region63: #{tpu_custom_call.1} parent=1 // pred_check_branch
      %126 = sbr.rel (0) target = $region65
    $region64: #{tpu_custom_call.1} parent=1 // pred_region
      %128 = dma.done [#allocation9], 512
    $region65: #{tpu_custom_call.1} parent=1 // pred_fallthru
      _
    // Predicated region
    $region66: #{tpu_custom_call.1} parent=1 // pred_check
      _
    $region67: #{tpu_custom_call.1} parent=1 // pred_check_branch
      %130 = sbr.rel (0) target = $region69
    $region68: #{tpu_custom_call.1} parent=1 // pred_region
      %132 = dma.done [#allocation12], 512
    $region69: #{tpu_custom_call.1} parent=1 // pred_fallthru
      _
    %v134 = vld [vmem:[%s0] sm:$0xff]
    %v135 = vcvt.s32.f32 %v134
    %v136 = vld [vmem:[#allocation2] sm:$0xf]
    %v137 = vld [vmem:[#allocation2 + $0x4] sm:$0xf]
    %v138 = vld [vmem:[#allocation2 + $0x8] sm:$0xf]
    %v139 = vld [vmem:[#allocation2 + $0xc] sm:$0xf]
    %v140 = vld [vmem:[#allocation2 + $0x10] sm:$0xf]
    %v141 = vld [vmem:[#allocation2 + $0x14] sm:$0xf]
    %v142 = vld [vmem:[#allocation2 + $0x18] sm:$0xf]
    %v143 = vld [vmem:[#allocation2 + $0x1c] sm:$0xf]
    %v144 = vunpack.c.l.bf16 %v136
    %v145 = vunpack.c.l.bf16 %v137
    %v146 = vunpack.c.l.bf16 %v138
    %v147 = vunpack.c.l.bf16 %v139
    %v148 = vunpack.c.l.bf16 %v140
    %v149 = vunpack.c.l.bf16 %v141
    %v150 = vunpack.c.l.bf16 %v142
    %v151 = vunpack.c.l.bf16 %v143
    %v152 = vlaneseq
    %v153 = vshrl.u32 %v152, 7
    %v154 = vsub.s32 %v134, 1
    %v155 = vrot.slane %v154, 1
    %v156 = vrot.slane %v154, 2
    %v157 = vrot.slane %v154, 3
    %v158 = vrot.slane %v154, 4
    %v159 = vrot.slane %v154, 5
    %v160 = vrot.slane %v154, 6
    %v161 = vrot.slane %v154, 7
    %v162 = vperm.slane %v154, 0
    %v163 = vperm.slane %v155, 0
    %v164 = vperm.slane %v156, 0
    %v165 = vperm.slane %v157, 0
    %v166 = vperm.slane %v158, 0
    %v167 = vperm.slane %v159, 0
    %v168 = vperm.slane %v160, 0
    %v169 = vperm.slane %v161, 0
    %vm170 = vcmp.eq.s32.totalorder %v153, %v162
    %vm171 = vcmp.eq.s32.totalorder %v153, %v163
    %vm172 = vcmp.eq.s32.totalorder %v153, %v164
    %vm173 = vcmp.eq.s32.totalorder %v153, %v165
    %vm174 = vcmp.eq.s32.totalorder %v153, %v166
    %vm175 = vcmp.eq.s32.totalorder %v153, %v167
    %vm176 = vcmp.eq.s32.totalorder %v153, %v168
    %vm177 = vcmp.eq.s32.totalorder %v153, %v169
    %v178 = vsel %vm170, 1, 0
    %v179 = vsel %vm171, 1, 0
    %v180 = vsel %vm172, 1, 0
    %v181 = vsel %vm173, 1, 0
    %v182 = vsel %vm174, 1, 0
    %v183 = vsel %vm175, 1, 0
    %v184 = vsel %vm176, 1, 0
    %v185 = vsel %vm177, 1, 0
    %v186 = vcvt.s32.f32 %v178
    %v187 = vcvt.s32.f32 %v179
    %v188 = vcvt.s32.f32 %v180
    %v189 = vcvt.s32.f32 %v181
    %v190 = vcvt.s32.f32 %v182
    %v191 = vcvt.s32.f32 %v183
    %v192 = vcvt.s32.f32 %v184
    %v193 = vcvt.s32.f32 %v185
    %195 = vset.pattern.permute.xlu0 0
    %196 = vperm.xlu0 %195, %v186
    %v197 = vpop.permute.xlu0 %196
    %200 = vset.pattern.permute.xlu0 0
    %201 = vperm.xlu0 %200, %v187
    %v202 = vpop.permute.xlu0 %201
    %205 = vset.pattern.permute.xlu0 0
    %206 = vperm.xlu0 %205, %v188
    %v207 = vpop.permute.xlu0 %206
    %210 = vset.pattern.permute.xlu0 0
    %211 = vperm.xlu0 %210, %v189
    %v212 = vpop.permute.xlu0 %211
    %215 = vset.pattern.permute.xlu0 0
    %216 = vperm.xlu0 %215, %v190
    %v217 = vpop.permute.xlu0 %216
    %220 = vset.pattern.permute.xlu0 0
    %221 = vperm.xlu0 %220, %v191
    %v222 = vpop.permute.xlu0 %221
    %225 = vset.pattern.permute.xlu0 0
    %226 = vperm.xlu0 %225, %v192
    %v227 = vpop.permute.xlu0 %226
    %230 = vset.pattern.permute.xlu0 0
    %231 = vperm.xlu0 %230, %v193
    %v232 = vpop.permute.xlu0 %231
    %v234 = vmul.f32 %v144, %v197
    %v235 = vmul.f32 %v145, %v202
    %v236 = vmul.f32 %v146, %v207
    %v237 = vmul.f32 %v147, %v212
    %v238 = vmul.f32 %v148, %v217
    %v239 = vmul.f32 %v149, %v222
    %v240 = vmul.f32 %v150, %v227
    %v241 = vmul.f32 %v151, %v232
    %vm242 = vcmask 261120
    %v243 = vsel %vm242, %v234, 0.0
    %v244 = vrot.slane %v243, 4
    %v245 = vadd.f32 %v243, %v244
    %v246 = vrot.slane %v245, 2
    %v247 = vadd.f32 %v245, %v246
    %v248 = vrot.slane %v247, 1
    %v249 = vadd.f32 %v247, %v248
    %v250 = vsel %vm242, %v235, 0.0
    %v251 = vrot.slane %v250, 4
    %v252 = vadd.f32 %v250, %v251
    %v253 = vrot.slane %v252, 2
    %v254 = vadd.f32 %v252, %v253
    %v255 = vrot.slane %v254, 1
    %v256 = vadd.f32 %v254, %v255
    %v257 = vsel %vm242, %v236, 0.0
    %v258 = vrot.slane %v257, 4
    %v259 = vadd.f32 %v257, %v258
    %v260 = vrot.slane %v259, 2
    %v261 = vadd.f32 %v259, %v260
    %v262 = vrot.slane %v261, 1
    %v263 = vadd.f32 %v261, %v262
    %v264 = vsel %vm242, %v237, 0.0
    %v265 = vrot.slane %v264, 4
    %v266 = vadd.f32 %v264, %v265
    %v267 = vrot.slane %v266, 2
    %v268 = vadd.f32 %v266, %v267
    %v269 = vrot.slane %v268, 1
    %v270 = vadd.f32 %v268, %v269
    %v271 = vsel %vm242, %v238, 0.0
    %v272 = vrot.slane %v271, 4
    %v273 = vadd.f32 %v271, %v272
    %v274 = vrot.slane %v273, 2
    %v275 = vadd.f32 %v273, %v274
    %v276 = vrot.slane %v275, 1
    %v277 = vadd.f32 %v275, %v276
    %v278 = vsel %vm242, %v239, 0.0
    %v279 = vrot.slane %v278, 4
    %v280 = vadd.f32 %v278, %v279
    %v281 = vrot.slane %v280, 2
    %v282 = vadd.f32 %v280, %v281
    %v283 = vrot.slane %v282, 1
    %v284 = vadd.f32 %v282, %v283
    %v285 = vsel %vm242, %v240, 0.0
    %v286 = vrot.slane %v285, 4
    %v287 = vadd.f32 %v285, %v286
    %v288 = vrot.slane %v287, 2
    %v289 = vadd.f32 %v287, %v288
    %v290 = vrot.slane %v289, 1
    %v291 = vadd.f32 %v289, %v290
    %v292 = vsel %vm242, %v241, 0.0
    %v293 = vrot.slane %v292, 4
    %v294 = vadd.f32 %v292, %v293
    %v295 = vrot.slane %v294, 2
    %v296 = vadd.f32 %v294, %v295
    %v297 = vrot.slane %v296, 1
    %v298 = vadd.f32 %v296, %v297
    %v299 = vsel %vm242, %v144, 0.0
    %v300 = vrot.slane %v299, 4
    %v301 = vadd.f32 %v299, %v300
    %v302 = vrot.slane %v301, 2
    %v303 = vadd.f32 %v301, %v302
    %v304 = vrot.slane %v303, 1
    %v305 = vadd.f32 %v303, %v304
    %v306 = vsel %vm242, %v145, 0.0
    %v307 = vrot.slane %v306, 4
    %v308 = vadd.f32 %v306, %v307
    %v309 = vrot.slane %v308, 2
    %v310 = vadd.f32 %v308, %v309
    %v311 = vrot.slane %v310, 1
    %v312 = vadd.f32 %v310, %v311
    %v313 = vsel %vm242, %v146, 0.0
    %v314 = vrot.slane %v313, 4
    %v315 = vadd.f32 %v313, %v314
    %v316 = vrot.slane %v315, 2
    %v317 = vadd.f32 %v315, %v316
    %v318 = vrot.slane %v317, 1
    %v319 = vadd.f32 %v317, %v318
    %v320 = vsel %vm242, %v147, 0.0
    %v321 = vrot.slane %v320, 4
    %v322 = vadd.f32 %v320, %v321
    %v323 = vrot.slane %v322, 2
    %v324 = vadd.f32 %v322, %v323
    %v325 = vrot.slane %v324, 1
    %v326 = vadd.f32 %v324, %v325
    %v327 = vsel %vm242, %v148, 0.0
    %v328 = vrot.slane %v327, 4
    %v329 = vadd.f32 %v327, %v328
    %v330 = vrot.slane %v329, 2
    %v331 = vadd.f32 %v329, %v330
    %v332 = vrot.slane %v331, 1
    %v333 = vadd.f32 %v331, %v332
    %v334 = vsel %vm242, %v149, 0.0
    %v335 = vrot.slane %v334, 4
    %v336 = vadd.f32 %v334, %v335
    %v337 = vrot.slane %v336, 2
    %v338 = vadd.f32 %v336, %v337
    %v339 = vrot.slane %v338, 1
    %v340 = vadd.f32 %v338, %v339
    %v341 = vsel %vm242, %v150, 0.0
    %v342 = vrot.slane %v341, 4
    %v343 = vadd.f32 %v341, %v342
    %v344 = vrot.slane %v343, 2
    %v345 = vadd.f32 %v343, %v344
    %v346 = vrot.slane %v345, 1
    %v347 = vadd.f32 %v345, %v346
    %v348 = vsel %vm242, %v151, 0.0
    %v349 = vrot.slane %v348, 4
    %v350 = vadd.f32 %v348, %v349
    %v351 = vrot.slane %v350, 2
    %v352 = vadd.f32 %v350, %v351
    %v353 = vrot.slane %v352, 1
    %v354 = vadd.f32 %v352, %v353
    %356 = vset.pattern.permute.xlu0 0
    %357 = vperm.xlu0 %356, %v135
    %v358 = vpop.permute.xlu0 %357
    %v359 = vrot.slane %v358, 1
    %v360 = vrot.slane %v358, 2
    %v361 = vrot.slane %v358, 3
    %v362 = vrot.slane %v358, 4
    %v363 = vrot.slane %v358, 5
    %v364 = vrot.slane %v358, 6
    %v365 = vrot.slane %v358, 7
    %v374 = vrcp.pop %v358
    %v375 = vmul.f32 %v358, %v374
    %v376 = vsub.f32 1.0, %v375
    %v377 = vmul.f32 %v374, %v376
    %v378 = vadd.f32 %v374, %v377
    %vm379 = vweird.f32 %v358
    %vm380 = vweird.f32 %v374
    %vm381 = vmor %vm379, %vm380
    %v382 = vsel %vm381, %v374, %v378
    %v383 = vand.u32 2147483647, %v358
    %vm384 = vcmp.eq.f32.partialorder %v383, 8.507059e+37
    %v385 = vand.u32 %v358, 2147483648
    %v386 = vor.u32 1.1754944e-38, %v385
    %v387 = vsel %vm384, %v386, %v382
    %v388 = vmul.f32 %v305, %v387
    %v389 = vrcp.pop %v359
    %v390 = vmul.f32 %v359, %v389
    %v391 = vsub.f32 1.0, %v390
    %v392 = vmul.f32 %v389, %v391
    %v393 = vadd.f32 %v389, %v392
    %vm394 = vweird.f32 %v359
    %vm395 = vweird.f32 %v389
    %vm396 = vmor %vm394, %vm395
    %v397 = vsel %vm396, %v389, %v393
    %v398 = vand.u32 2147483647, %v359
    %vm399 = vcmp.eq.f32.partialorder %v398, 8.507059e+37
    %v400 = vand.u32 %v359, 2147483648
    %v401 = vor.u32 1.1754944e-38, %v400
    %v402 = vsel %vm399, %v401, %v397
    %v403 = vmul.f32 %v312, %v402
    %v404 = vrcp.pop %v360
    %v405 = vmul.f32 %v360, %v404
    %v406 = vsub.f32 1.0, %v405
    %v407 = vmul.f32 %v404, %v406
    %v408 = vadd.f32 %v404, %v407
    %vm409 = vweird.f32 %v360
    %vm410 = vweird.f32 %v404
    %vm411 = vmor %vm409, %vm410
    %v412 = vsel %vm411, %v404, %v408
    %v413 = vand.u32 2147483647, %v360
    %vm414 = vcmp.eq.f32.partialorder %v413, 8.507059e+37
    %v415 = vand.u32 %v360, 2147483648
    %v416 = vor.u32 1.1754944e-38, %v415
    %v417 = vsel %vm414, %v416, %v412
    %v418 = vmul.f32 %v319, %v417
    %v419 = vrcp.pop %v361
    %v420 = vmul.f32 %v361, %v419
    %v421 = vsub.f32 1.0, %v420
    %v422 = vmul.f32 %v419, %v421
    %v423 = vadd.f32 %v419, %v422
    %vm424 = vweird.f32 %v361
    %vm425 = vweird.f32 %v419
    %vm426 = vmor %vm424, %vm425
    %v427 = vsel %vm426, %v419, %v423
    %v428 = vand.u32 2147483647, %v361
    %vm429 = vcmp.eq.f32.partialorder %v428, 8.507059e+37
    %v430 = vand.u32 %v361, 2147483648
    %v431 = vor.u32 1.1754944e-38, %v430
    %v432 = vsel %vm429, %v431, %v427
    %v433 = vmul.f32 %v326, %v432
    %v434 = vrcp.pop %v362
    %v435 = vmul.f32 %v362, %v434
    %v436 = vsub.f32 1.0, %v435
    %v437 = vmul.f32 %v434, %v436
    %v438 = vadd.f32 %v434, %v437
    %vm439 = vweird.f32 %v362
    %vm440 = vweird.f32 %v434
    %vm441 = vmor %vm439, %vm440
    %v442 = vsel %vm441, %v434, %v438
    %v443 = vand.u32 2147483647, %v362
    %vm444 = vcmp.eq.f32.partialorder %v443, 8.507059e+37
    %v445 = vand.u32 %v362, 2147483648
    %v446 = vor.u32 1.1754944e-38, %v445
    %v447 = vsel %vm444, %v446, %v442
    %v448 = vmul.f32 %v333, %v447
    %v449 = vrcp.pop %v363
    %v450 = vmul.f32 %v363, %v449
    %v451 = vsub.f32 1.0, %v450
    %v452 = vmul.f32 %v449, %v451
    %v453 = vadd.f32 %v449, %v452
    %vm454 = vweird.f32 %v363
    %vm455 = vweird.f32 %v449
    %vm456 = vmor %vm454, %vm455
    %v457 = vsel %vm456, %v449, %v453
    %v458 = vand.u32 2147483647, %v363
    %vm459 = vcmp.eq.f32.partialorder %v458, 8.507059e+37
    %v460 = vand.u32 %v363, 2147483648
    %v461 = vor.u32 1.1754944e-38, %v460
    %v462 = vsel %vm459, %v461, %v457
    %v463 = vmul.f32 %v340, %v462
    %v464 = vrcp.pop %v364
    %v465 = vmul.f32 %v364, %v464
    %v466 = vsub.f32 1.0, %v465
    %v467 = vmul.f32 %v464, %v466
    %v468 = vadd.f32 %v464, %v467
    %vm469 = vweird.f32 %v364
    %vm470 = vweird.f32 %v464
    %vm471 = vmor %vm469, %vm470
    %v472 = vsel %vm471, %v464, %v468
    %v473 = vand.u32 2147483647, %v364
    %vm474 = vcmp.eq.f32.partialorder %v473, 8.507059e+37
    %v475 = vand.u32 %v364, 2147483648
    %v476 = vor.u32 1.1754944e-38, %v475
    %v477 = vsel %vm474, %v476, %v472
    %v478 = vmul.f32 %v347, %v477
    %v479 = vrcp.pop %v365
    %v480 = vmul.f32 %v365, %v479
    %v481 = vsub.f32 1.0, %v480
    %v482 = vmul.f32 %v479, %v481
    %v483 = vadd.f32 %v479, %v482
    %vm484 = vweird.f32 %v365
    %vm485 = vweird.f32 %v479
    %vm486 = vmor %vm484, %vm485
    %v487 = vsel %vm486, %v479, %v483
    %v488 = vand.u32 2147483647, %v365
    %vm489 = vcmp.eq.f32.partialorder %v488, 8.507059e+37
    %v490 = vand.u32 %v365, 2147483648
    %v491 = vor.u32 1.1754944e-38, %v490
    %v492 = vsel %vm489, %v491, %v487
    %v493 = vmul.f32 %v354, %v492
    %v494 = vpack.c.bf16 %v145, %v144
    %v495 = vpack.c.bf16 %v147, %v146
    %v496 = vpack.c.bf16 %v149, %v148
    %v497 = vpack.c.bf16 %v151, %v150
    %v498 = vld [vmem:[#allocation5] sm:$0xf]
    %v499 = vld [vmem:[#allocation5 + $0x4] sm:$0xf]
    %v500 = vld [vmem:[#allocation5 + $0x8] sm:$0xf]
    %v501 = vld [vmem:[#allocation5 + $0xc] sm:$0xf]
    %v506 = vunpack.c.l.b16 %v498
    %v507 = vunpack.c.l.b16 %v499
    %v508 = vunpack.c.l.b16 %v500
    %v509 = vunpack.c.l.b16 %v501
    %v510 = vpack.c.b16 %v507, %v506
    %v511 = vpack.c.b16 %v509, %v508
    %v515 = vsel %vm242, %v494, 0
    %v518 = vsel %vm242, %v495, 0
    %v521 = vsel %vm242, %v496, 0
    %v524 = vsel %vm242, %v497, 0
    %526 = vmatpush.bf16.msra.mxu0 0
    %527 = vmatpush.bf16.msra.mxu0 0
    %528 = vmatpush.bf16.msra.mxu0 0
    %529 = vmatpush.bf16.msra.mxu0 0
    %530 = vmatpush.bf16.msra.mxu0 0
    %531 = vmatpush.bf16.msra.mxu0 0
    %532 = vmatpush.bf16.msra.mxu0 %v511
    %533 = vmatpush.bf16.msra.mxu0 %v510
    %534 = vmatmul.bf16.gmra.mxu0 %v515
    %v535 = vpop.f32.mrf.mxu0
    %v536 = vadd.f32 0.0, %v535
    %v537 = vpop.f32.mrf.mxu0
    %v538 = vadd.f32 0.0, %v537
    %539 = vmatmul.bf16.gmra.mxu0 %v518
    %v540 = vpop.f32.mrf.mxu0
    %v541 = vadd.f32 0.0, %v540
    %v542 = vpop.f32.mrf.mxu0
    %v543 = vadd.f32 0.0, %v542
    %544 = vmatmul.bf16.gmra.mxu0 %v521
    %v545 = vpop.f32.mrf.mxu0
    %v546 = vadd.f32 0.0, %v545
    %v547 = vpop.f32.mrf.mxu0
    %v548 = vadd.f32 0.0, %v547
    %549 = vmatmul.bf16.gmra.mxu0 %v524
    %v550 = vpop.f32.mrf.mxu0
    %v551 = vadd.f32 0.0, %v550
    %v552 = vpop.f32.mrf.mxu0
    %v553 = vadd.f32 0.0, %v552
    %554 = vdwg.mxu0
    %v555 = vld [vmem:[#allocation7] sm:$0xff]
    %v556 = vld [vmem:[#allocation7 + $0x8] sm:$0xff]
    %v557 = vld [vmem:[#allocation7 + $0x10] sm:$0xff]
    %v558 = vld [vmem:[#allocation7 + $0x18] sm:$0xff]
    %v559 = vld [vmem:[#allocation8] sm:$0xff]
    %v560 = vld [vmem:[#allocation8 + $0x8] sm:$0xff]
    %v561 = vld [vmem:[#allocation8 + $0x10] sm:$0xff]
    %v562 = vld [vmem:[#allocation8 + $0x18] sm:$0xff]
    %v571 = vrot.slane %v403, 7
    %vm572 = vcmask 1041409
    %v573 = vsel %vm572, %v571, %v388
    %v574 = vrot.slane %v418, 6
    %vm575 = vcmask 1042434
    %v576 = vsel %vm575, %v574, %v573
    %v577 = vrot.slane %v433, 5
    %vm578 = vcmask 1043459
    %v579 = vsel %vm578, %v577, %v576
    %v580 = vrot.slane %v448, 4
    %vm581 = vcmask 1044484
    %v582 = vsel %vm581, %v580, %v579
    %v583 = vrot.slane %v463, 3
    %vm584 = vcmask 1045509
    %v585 = vsel %vm584, %v583, %v582
    %v586 = vrot.slane %v478, 2
    %vm587 = vcmask 1046534
    %v588 = vsel %vm587, %v586, %v585
    %v589 = vrot.slane %v493, 1
    %vm590 = vcmask 1047559
    %v591 = vsel %vm590, %v589, %v588
    %v592 = vsel %vm242, %v591, 0
    %594 = vmatpush.msra.mxu0 0.0
    %595 = vmatpush.msra.mxu0 0.0
    %596 = vmatpush.msra.mxu0 0.0
    %597 = vmatpush.msra.mxu0 0.0
    %598 = vmatpush.msra.mxu0 0.0
    %599 = vmatpush.msra.mxu0 0.0
    %600 = vmatpush.msra.mxu0 0.0
    %601 = vmatpush.msra.mxu0 0.0
    %602 = vmatpush.msra.mxu0 0.0
    %603 = vmatpush.msra.mxu0 0.0
    %604 = vmatpush.msra.mxu0 0.0
    %605 = vmatpush.msra.mxu0 0.0
    %606 = vmatpush.msra.mxu0 %v562
    %607 = vmatpush.msra.mxu0 %v561
    %608 = vmatpush.msra.mxu0 %v560
    %609 = vmatpush.msra.mxu0 %v559
    %610 = vmatmul.f32.gmra.mxu0 %v592
    %v611 = vpop.f32.mrf.mxu0
    %v612 = vadd.f32 0.0, %v611
    %613 = vdwg.mxu0
    %v622 = vsel %vm572, %v256, %v249
    %v623 = vsel %vm575, %v263, %v622
    %v624 = vsel %vm578, %v270, %v623
    %v625 = vsel %vm581, %v277, %v624
    %v626 = vsel %vm584, %v284, %v625
    %v627 = vsel %vm587, %v291, %v626
    %v628 = vsel %vm590, %v298, %v627
    %v629 = vsel %vm242, %v628, 0
    %631 = vmatpush.msra.mxu0 0.0
    %632 = vmatpush.msra.mxu0 0.0
    %633 = vmatpush.msra.mxu0 0.0
    %634 = vmatpush.msra.mxu0 0.0
    %635 = vmatpush.msra.mxu0 0.0
    %636 = vmatpush.msra.mxu0 0.0
    %637 = vmatpush.msra.mxu0 0.0
    %638 = vmatpush.msra.mxu0 0.0
    %639 = vmatpush.msra.mxu0 0.0
    %640 = vmatpush.msra.mxu0 0.0
    %641 = vmatpush.msra.mxu0 0.0
    %642 = vmatpush.msra.mxu0 0.0
    %643 = vmatpush.msra.mxu0 %v558
    %644 = vmatpush.msra.mxu0 %v557
    %645 = vmatpush.msra.mxu0 %v556
    %646 = vmatpush.msra.mxu0 %v555
    %647 = vmatmul.f32.gmra.mxu0 %v629
    %v648 = vpop.f32.mrf.mxu0
    %v649 = vadd.f32 %v612, %v648
    %650 = vdwg.mxu0
    %v651 = vld [vmem:[%s6] sm:$0x1]
    %v653 = vperm.slane %v651, 0
    %v655 = vadd.f32 %v649, %v653
    %v657 = vrot.slane %v655, 1
    %v658 = vrot.slane %v655, 2
    %v659 = vrot.slane %v655, 3
    %v660 = vrot.slane %v655, 4
    %v661 = vrot.slane %v655, 5
    %v662 = vrot.slane %v655, 6
    %v663 = vrot.slane %v655, 7
    %v664 = vperm.slane %v655, 0
    %v665 = vperm.slane %v657, 0
    %v666 = vperm.slane %v658, 0
    %v667 = vperm.slane %v659, 0
    %v668 = vperm.slane %v660, 0
    %v669 = vperm.slane %v661, 0
    %v670 = vperm.slane %v662, 0
    %v671 = vperm.slane %v663, 0
    %v680 = vadd.f32 %v536, %v664
    %v681 = vadd.f32 %v538, %v665
    %v682 = vadd.f32 %v541, %v666
    %v683 = vadd.f32 %v543, %v667
    %v684 = vadd.f32 %v546, %v668
    %v685 = vadd.f32 %v548, %v669
    %v686 = vadd.f32 %v551, %v670
    %v687 = vadd.f32 %v553, %v671
    %v688 = vxor.u32 %v680, 2147483648
    %v689 = vxor.u32 %v681, 2147483648
    %v690 = vxor.u32 %v682, 2147483648
    %v691 = vxor.u32 %v683, 2147483648
    %v692 = vxor.u32 %v684, 2147483648
    %v693 = vxor.u32 %v685, 2147483648
    %v694 = vxor.u32 %v686, 2147483648
    %v695 = vxor.u32 %v687, 2147483648
    %v696 = vmul.f32 %v688, 1.442695
    %v697 = vpow.pop %v696
    %v698 = vmul.f32 %v689, 1.442695
    %v699 = vpow.pop %v698
    %v700 = vmul.f32 %v690, 1.442695
    %v701 = vpow.pop %v700
    %v702 = vmul.f32 %v691, 1.442695
    %v703 = vpow.pop %v702
    %v704 = vmul.f32 %v692, 1.442695
    %v705 = vpow.pop %v704
    %v706 = vmul.f32 %v693, 1.442695
    %v707 = vpow.pop %v706
    %v708 = vmul.f32 %v694, 1.442695
    %v709 = vpow.pop %v708
    %v710 = vmul.f32 %v695, 1.442695
    %v711 = vpow.pop %v710
    %v712 = vadd.f32 %v697, 1.0
    %v713 = vadd.f32 %v699, 1.0
    %v714 = vadd.f32 %v701, 1.0
    %v715 = vadd.f32 %v703, 1.0
    %v716 = vadd.f32 %v705, 1.0
    %v717 = vadd.f32 %v707, 1.0
    %v718 = vadd.f32 %v709, 1.0
    %v719 = vadd.f32 %v711, 1.0
    %v720 = vrcp.pop %v712
    %v721 = vmul.f32 %v712, %v720
    %v722 = vsub.f32 1.0, %v721
    %v723 = vmul.f32 %v720, %v722
    %v724 = vadd.f32 %v720, %v723
    %vm725 = vweird.f32 %v712
    %vm726 = vweird.f32 %v720
    %vm727 = vmor %vm725, %vm726
    %v728 = vsel %vm727, %v720, %v724
    %v729 = vand.u32 2147483647, %v712
    %vm730 = vcmp.eq.f32.partialorder %v729, 8.507059e+37
    %v731 = vand.u32 %v712, 2147483648
    %v732 = vor.u32 1.1754944e-38, %v731
    %v733 = vsel %vm730, %v732, %v728
    %v734 = vmul.f32 1.0, %v733
    %v735 = vrcp.pop %v713
    %v736 = vmul.f32 %v713, %v735
    %v737 = vsub.f32 1.0, %v736
    %v738 = vmul.f32 %v735, %v737
    %v739 = vadd.f32 %v735, %v738
    %vm740 = vweird.f32 %v713
    %vm741 = vweird.f32 %v735
    %vm742 = vmor %vm740, %vm741
    %v743 = vsel %vm742, %v735, %v739
    %v744 = vand.u32 2147483647, %v713
    %vm745 = vcmp.eq.f32.partialorder %v744, 8.507059e+37
    %v746 = vand.u32 %v713, 2147483648
    %v747 = vor.u32 1.1754944e-38, %v746
    %v748 = vsel %vm745, %v747, %v743
    %v749 = vmul.f32 1.0, %v748
    %v750 = vrcp.pop %v714
    %v751 = vmul.f32 %v714, %v750
    %v752 = vsub.f32 1.0, %v751
    %v753 = vmul.f32 %v750, %v752
    %v754 = vadd.f32 %v750, %v753
    %vm755 = vweird.f32 %v714
    %vm756 = vweird.f32 %v750
    %vm757 = vmor %vm755, %vm756
    %v758 = vsel %vm757, %v750, %v754
    %v759 = vand.u32 2147483647, %v714
    %vm760 = vcmp.eq.f32.partialorder %v759, 8.507059e+37
    %v761 = vand.u32 %v714, 2147483648
    %v762 = vor.u32 1.1754944e-38, %v761
    %v763 = vsel %vm760, %v762, %v758
    %v764 = vmul.f32 1.0, %v763
    %v765 = vrcp.pop %v715
    %v766 = vmul.f32 %v715, %v765
    %v767 = vsub.f32 1.0, %v766
    %v768 = vmul.f32 %v765, %v767
    %v769 = vadd.f32 %v765, %v768
    %vm770 = vweird.f32 %v715
    %vm771 = vweird.f32 %v765
    %vm772 = vmor %vm770, %vm771
    %v773 = vsel %vm772, %v765, %v769
    %v774 = vand.u32 2147483647, %v715
    %vm775 = vcmp.eq.f32.partialorder %v774, 8.507059e+37
    %v776 = vand.u32 %v715, 2147483648
    %v777 = vor.u32 1.1754944e-38, %v776
    %v778 = vsel %vm775, %v777, %v773
    %v779 = vmul.f32 1.0, %v778
    %v780 = vrcp.pop %v716
    %v781 = vmul.f32 %v716, %v780
    %v782 = vsub.f32 1.0, %v781
    %v783 = vmul.f32 %v780, %v782
    %v784 = vadd.f32 %v780, %v783
    %vm785 = vweird.f32 %v716
    %vm786 = vweird.f32 %v780
    %vm787 = vmor %vm785, %vm786
    %v788 = vsel %vm787, %v780, %v784
    %v789 = vand.u32 2147483647, %v716
    %vm790 = vcmp.eq.f32.partialorder %v789, 8.507059e+37
    %v791 = vand.u32 %v716, 2147483648
    %v792 = vor.u32 1.1754944e-38, %v791
    %v793 = vsel %vm790, %v792, %v788
    %v794 = vmul.f32 1.0, %v793
    %v795 = vrcp.pop %v717
    %v796 = vmul.f32 %v717, %v795
    %v797 = vsub.f32 1.0, %v796
    %v798 = vmul.f32 %v795, %v797
    %v799 = vadd.f32 %v795, %v798
    %vm800 = vweird.f32 %v717
    %vm801 = vweird.f32 %v795
    %vm802 = vmor %vm800, %vm801
    %v803 = vsel %vm802, %v795, %v799
    %v804 = vand.u32 2147483647, %v717
    %vm805 = vcmp.eq.f32.partialorder %v804, 8.507059e+37
    %v806 = vand.u32 %v717, 2147483648
    %v807 = vor.u32 1.1754944e-38, %v806
    %v808 = vsel %vm805, %v807, %v803
    %v809 = vmul.f32 1.0, %v808
    %v810 = vrcp.pop %v718
    %v811 = vmul.f32 %v718, %v810
    %v812 = vsub.f32 1.0, %v811
    %v813 = vmul.f32 %v810, %v812
    %v814 = vadd.f32 %v810, %v813
    %vm815 = vweird.f32 %v718
    %vm816 = vweird.f32 %v810
    %vm817 = vmor %vm815, %vm816
    %v818 = vsel %vm817, %v810, %v814
    %v819 = vand.u32 2147483647, %v718
    %vm820 = vcmp.eq.f32.partialorder %v819, 8.507059e+37
    %v821 = vand.u32 %v718, 2147483648
    %v822 = vor.u32 1.1754944e-38, %v821
    %v823 = vsel %vm820, %v822, %v818
    %v824 = vmul.f32 1.0, %v823
    %v825 = vrcp.pop %v719
    %v826 = vmul.f32 %v719, %v825
    %v827 = vsub.f32 1.0, %v826
    %v828 = vmul.f32 %v825, %v827
    %v829 = vadd.f32 %v825, %v828
    %vm830 = vweird.f32 %v719
    %vm831 = vweird.f32 %v825
    %vm832 = vmor %vm830, %vm831
    %v833 = vsel %vm832, %v825, %v829
    %v834 = vand.u32 2147483647, %v719
    %vm835 = vcmp.eq.f32.partialorder %v834, 8.507059e+37
    %v836 = vand.u32 %v719, 2147483648
    %v837 = vor.u32 1.1754944e-38, %v836
    %v838 = vsel %vm835, %v837, %v833
    %v839 = vmul.f32 1.0, %v838
    %v840 = vld [vmem:[%s5] sm:$0x1]
    %v842 = vperm.slane %v840, 0
    %v844 = vmul.f32 %v734, %v842
    %v845 = vmul.f32 %v749, %v842
    %v846 = vmul.f32 %v764, %v842
    %v847 = vmul.f32 %v779, %v842
    %v848 = vmul.f32 %v794, %v842
    %v849 = vmul.f32 %v809, %v842
    %v850 = vmul.f32 %v824, %v842
    %v851 = vmul.f32 %v839, %v842
    %v852 = vsel %vm242, %v844, 0.0
    %853 = vadd.xlane.f32.xlu0 %v852
    %v854 = vpop.xlane.xlu0 %853
    %v855 = vsel %vm242, %v845, 0.0
    %856 = vadd.xlane.f32.xlu0 %v855
    %v857 = vpop.xlane.xlu0 %856
    %v858 = vsel %vm242, %v846, 0.0
    %859 = vadd.xlane.f32.xlu0 %v858
    %v860 = vpop.xlane.xlu0 %859
    %v861 = vsel %vm242, %v847, 0.0
    %862 = vadd.xlane.f32.xlu0 %v861
    %v863 = vpop.xlane.xlu0 %862
    %v864 = vsel %vm242, %v848, 0.0
    %865 = vadd.xlane.f32.xlu0 %v864
    %v866 = vpop.xlane.xlu0 %865
    %v867 = vsel %vm242, %v849, 0.0
    %868 = vadd.xlane.f32.xlu0 %v867
    %v869 = vpop.xlane.xlu0 %868
    %v870 = vsel %vm242, %v850, 0.0
    %871 = vadd.xlane.f32.xlu0 %v870
    %v872 = vpop.xlane.xlu0 %871
    %v873 = vsel %vm242, %v851, 0.0
    %874 = vadd.xlane.f32.xlu0 %v873
    %v875 = vpop.xlane.xlu0 %874
    %v876 = vmul.f32 %v854, %v144
    %v877 = vmul.f32 %v857, %v145
    %v878 = vmul.f32 %v860, %v146
    %v879 = vmul.f32 %v863, %v147
    %v880 = vmul.f32 %v866, %v148
    %v881 = vmul.f32 %v869, %v149
    %v882 = vmul.f32 %v872, %v150
    %v883 = vmul.f32 %v875, %v151
    %v884 = vsel %vm242, %v876, 0.0
    %v885 = vrot.slane %v884, 4
    %v886 = vadd.f32 %v884, %v885
    %v887 = vrot.slane %v886, 2
    %v888 = vadd.f32 %v886, %v887
    %v889 = vrot.slane %v888, 1
    %v890 = vadd.f32 %v888, %v889
    %v891 = vsel %vm242, %v877, 0.0
    %v892 = vrot.slane %v891, 4
    %v893 = vadd.f32 %v891, %v892
    %v894 = vrot.slane %v893, 2
    %v895 = vadd.f32 %v893, %v894
    %v896 = vrot.slane %v895, 1
    %v897 = vadd.f32 %v895, %v896
    %v898 = vsel %vm242, %v878, 0.0
    %v899 = vrot.slane %v898, 4
    %v900 = vadd.f32 %v898, %v899
    %v901 = vrot.slane %v900, 2
    %v902 = vadd.f32 %v900, %v901
    %v903 = vrot.slane %v902, 1
    %v904 = vadd.f32 %v902, %v903
    %v905 = vsel %vm242, %v879, 0.0
    %v906 = vrot.slane %v905, 4
    %v907 = vadd.f32 %v905, %v906
    %v908 = vrot.slane %v907, 2
    %v909 = vadd.f32 %v907, %v908
    %v910 = vrot.slane %v909, 1
    %v911 = vadd.f32 %v909, %v910
    %v912 = vsel %vm242, %v880, 0.0
    %v913 = vrot.slane %v912, 4
    %v914 = vadd.f32 %v912, %v913
    %v915 = vrot.slane %v914, 2
    %v916 = vadd.f32 %v914, %v915
    %v917 = vrot.slane %v916, 1
    %v918 = vadd.f32 %v916, %v917
    %v919 = vsel %vm242, %v881, 0.0
    %v920 = vrot.slane %v919, 4
    %v921 = vadd.f32 %v919, %v920
    %v922 = vrot.slane %v921, 2
    %v923 = vadd.f32 %v921, %v922
    %v924 = vrot.slane %v923, 1
    %v925 = vadd.f32 %v923, %v924
    %v926 = vsel %vm242, %v882, 0.0
    %v927 = vrot.slane %v926, 4
    %v928 = vadd.f32 %v926, %v927
    %v929 = vrot.slane %v928, 2
    %v930 = vadd.f32 %v928, %v929
    %v931 = vrot.slane %v930, 1
    %v932 = vadd.f32 %v930, %v931
    %v933 = vsel %vm242, %v883, 0.0
    %v934 = vrot.slane %v933, 4
    %v935 = vadd.f32 %v933, %v934
    %v936 = vrot.slane %v935, 2
    %v937 = vadd.f32 %v935, %v936
    %v938 = vrot.slane %v937, 1
    %v939 = vadd.f32 %v937, %v938
    %v940 = vadd.f32 %v890, %v388
    %v941 = vadd.f32 %v897, %v403
    %v942 = vadd.f32 %v904, %v418
    %v943 = vadd.f32 %v911, %v433
    %v944 = vadd.f32 %v918, %v448
    %v945 = vadd.f32 %v925, %v463
    %v946 = vadd.f32 %v932, %v478
    %v947 = vadd.f32 %v939, %v493
    %v948 = vld [vmem:[#allocation10] sm:$0xff]
    %v949 = vld [vmem:[#allocation10 + $0x8] sm:$0xff]
    %v950 = vld [vmem:[#allocation10 + $0x10] sm:$0xff]
    %v951 = vld [vmem:[#allocation10 + $0x18] sm:$0xff]
    %v952 = vld [vmem:[%s8] sm:$0x1]
    %v954 = vperm.slane %v952, 0
    %v964 = vrot.slane %v941, 7
    %v965 = vsel %vm572, %v964, %v940
    %v966 = vrot.slane %v942, 6
    %v967 = vsel %vm575, %v966, %v965
    %v968 = vrot.slane %v943, 5
    %v969 = vsel %vm578, %v968, %v967
    %v970 = vrot.slane %v944, 4
    %v971 = vsel %vm581, %v970, %v969
    %v972 = vrot.slane %v945, 3
    %v973 = vsel %vm584, %v972, %v971
    %v974 = vrot.slane %v946, 2
    %v975 = vsel %vm587, %v974, %v973
    %v976 = vrot.slane %v947, 1
    %v977 = vsel %vm590, %v976, %v975
    %v978 = vsel %vm242, %v977, 0
    %980 = vmatpush.msra.mxu0 0.0
    %981 = vmatpush.msra.mxu0 0.0
    %982 = vmatpush.msra.mxu0 0.0
    %983 = vmatpush.msra.mxu0 0.0
    %984 = vmatpush.msra.mxu0 0.0
    %985 = vmatpush.msra.mxu0 0.0
    %986 = vmatpush.msra.mxu0 0.0
    %987 = vmatpush.msra.mxu0 0.0
    %988 = vmatpush.msra.mxu0 0.0
    %989 = vmatpush.msra.mxu0 0.0
    %990 = vmatpush.msra.mxu0 0.0
    %991 = vmatpush.msra.mxu0 0.0
    %992 = vmatpush.msra.mxu0 %v951
    %993 = vmatpush.msra.mxu0 %v950
    %994 = vmatpush.msra.mxu0 %v949
    %995 = vmatpush.msra.mxu0 %v948
    %996 = vmatmul.f32.gmra.mxu0 %v978
    %v997 = vpop.f32.mrf.mxu0
    %v998 = vadd.f32 %v954, %v997
    %999 = vdwg.mxu0
    %v1000 = vtanh.pop %v998
    %v1001 = vld [vmem:[#allocation11] sm:$0xff]
    %v1002 = vld [vmem:[#allocation11 + $0x8] sm:$0xff]
    %v1003 = vld [vmem:[#allocation11 + $0x10] sm:$0xff]
    %v1004 = vld [vmem:[#allocation11 + $0x18] sm:$0xff]
    %v1005 = vld [vmem:[%s10] sm:$0x1]
    %v1007 = vperm.slane %v1005, 0
    %1009 = vmatpush.msra.mxu0 0.0
    %1010 = vmatpush.msra.mxu0 0.0
    %1011 = vmatpush.msra.mxu0 0.0
    %1012 = vmatpush.msra.mxu0 0.0
    %1013 = vmatpush.msra.mxu0 0.0
    %1014 = vmatpush.msra.mxu0 0.0
    %1015 = vmatpush.msra.mxu0 0.0
    %1016 = vmatpush.msra.mxu0 0.0
    %1017 = vmatpush.msra.mxu0 0.0
    %1018 = vmatpush.msra.mxu0 0.0
    %1019 = vmatpush.msra.mxu0 0.0
    %1020 = vmatpush.msra.mxu0 0.0
    %1021 = vmatpush.msra.mxu0 %v1004
    %1022 = vmatpush.msra.mxu0 %v1003
    %1023 = vmatpush.msra.mxu0 %v1002
    %1024 = vmatpush.msra.mxu0 %v1001
    %1025 = vmatmul.f32.gmra.mxu0 %v629
    %v1026 = vpop.f32.mrf.mxu0
    %v1027 = vadd.f32 %v1007, %v1026
    %1028 = vdwg.mxu0
    %v1029 = vtanh.pop %v1027
    %v1030 = vmul.f32 %v1000, %v1029
    %1031 = vst.msk [vmem:[#allocation13] sm:$0xff] %vm242, %v1030
    // Predicated region
    $region70: #{tpu_custom_call.1} parent=1 // pred_check
      _
    $region71: #{tpu_custom_call.1} parent=1 // pred_check_branch
      %1033 = sbr.rel (0) target = $region73
    $region72: #{tpu_custom_call.1} parent=1 // pred_region
      %1035 = vsyncadd [#allocation4], 0
      %s1037 = sshll.u32 [#allocation13], 4
      %s1038 = int_to_ptr.vmem [resolvable:$true] %s1037
      %s1039 = sshll.u32 %s11, 4
      %s1040 = int_to_ptr.hbm [resolvable:$true] %s1039
      %1042 = dma.vmem_to_hbm [thread:$0]  %s1038, 128, %s1040, [#allocation4]
    $region73: #{tpu_custom_call.1} parent=1 // pred_fallthru
      _
    // Predicated region
    $region74: #{tpu_custom_call.1} parent=1 // pred_check
      _
    $region75: #{tpu_custom_call.1} parent=1 // pred_check_branch
      %1044 = sbr.rel (0) target = $region77
    $region76: #{tpu_custom_call.1} parent=1 // pred_region
      %1046 = dma.done [#allocation4], 128
    $region77: #{tpu_custom_call.1} parent=1 // pred_fallthru
      _
    %1047 = vsyncpa [#allocation3], 1
    %1048 = vsyncpa [#allocation6], 1
    %1049 = vsyncpa [#allocation9], 1
    %1050 = vsyncpa [#allocation12], 1
    %1051 = vsyncpa [#allocation4], 1

</llo_original>
